<compile_context>
chip_gen: v7x
topology: tpu7x:2x2x1
jax: 0.10.0
libtpu: 0.0.40
codegen_flags: <defaults>
</compile_context>

<pallas_src>
import functools

import jax
import jax.numpy as jnp
import numpy as np
from jax.experimental import pallas as pl
from jax.experimental.pallas import tpu as pltpu


def _round_up(x, m):
    return ((x + m - 1) // m) * m


def _device_kind():
    try:
        return jax.devices()[0].device_kind.lower()
    except Exception:
        return ""


def _default_num_splits(kind):
    # Only v7x has 2 TensorCores per chip; on v5e/v6e a leading "parallel"
    # axis is just a serial loop (extra steps, extra padding, extra slab).
    return 2 if "v7" in kind else 1


def _default_tile_bytes(kind):
    # Per-step input bytes needed to hide the ~0.35 us grid-step overhead at
    # each generation's HBM bandwidth (double-buffered => 2x this in VMEM).
    if "v7" in kind:
        return 2 * 1024 * 1024          # 3.2 TB/s/TC -> ~1.1 MB/step minimum
    if "v6" in kind:
        return 1 * 1024 * 1024          # ~1.4 TB/s
    return 512 * 1024                   # v5e (0.82 TB/s) & unknown backends


def _expert_loss_kernel(x_ref, out_ref, acc_ref, *, num_experts, label,
                        true_b, tile_b, inv_n):
    # Grid = (splits, tiles_per_split).
    # x_ref  : VMEM (E, tile_b) logits tile (experts x batch-lanes)
    # out_ref: VMEM (8, 128)    partial-mean slab for this split
    # acc_ref: VMEM (E, tile_b) f32 running element-wise accumulator
    c = pl.program_id(0)
    t = pl.program_id(1)
    n_t = pl.num_programs(1)

    @pl.when(t == 0)
    def _init():
        acc_ref[...] = jnp.zeros_like(acc_ref)

    x = x_ref[...].astype(jnp.float32)                        # (E, tile_b)

    # One-hot target as a baked (E, 1) constant (label & E are compile-time).
    row = jax.lax.broadcasted_iota(jnp.int32, (num_experts, 1), 0)
    gt = (row == label).astype(jnp.float32)

    # Numerically-stable BCE-with-logits per element.
    per = jnp.maximum(x, 0.0) - x * gt + jnp.log1p(jnp.exp(-jnp.abs(x)))
    # TODO(synk): on v7x with bf16 ingress the single EUP slot (exp + log1p per
    # element) can become binding; swap log1p for a short VPU polynomial then.

    col0 = (c * n_t + t) * tile_b               # first global batch column

    @pl.when(col0 + tile_b <= true_b)           # steady state: fully-valid tile
    def _full_tile():
        acc_ref[...] += per

    @pl.when(col0 + tile_b > true_b)            # tail / fully-padded tiles only
    def _tail_tile():
        col = col0 + jax.lax.broadcasted_iota(jnp.int32, per.shape, 1)
        # Mask the WHOLE per-element loss (incl. the -x*gt term) on padding.
        acc_ref[...] += jnp.where(col < true_b, per, 0.0)

    @pl.when(t == n_t - 1)
    def _finalize():
        total = jnp.sum(acc_ref[...], keepdims=True) * inv_n   # (1, 1)
        out_ref[...] = jnp.broadcast_to(total, out_ref.shape)


def expert_loss(expert_predictions, label, *, num_splits=None, tile_bytes=None):
    """BCEWithLogitsLoss(cat(expert_predictions, 1), one_hot(label, E)).

    expert_predictions: list/tuple of [B, 1] logit arrays (one per expert),
      or a pre-stacked [E, B] slab (preferred: skips a full relayout pass).
    label: python int class index in [0, num_experts).
    """
    if isinstance(expert_predictions, (list, tuple)):
        # NOTE: stacking E lane-sparse [B, 1] arrays is an un-hidden XLA
        # relayout pass over all the data; pass an [E, B] slab to avoid it.
        logits = jnp.stack(
            [jnp.reshape(p, (-1,)) for p in expert_predictions], axis=0)
    else:
        logits = jnp.asarray(expert_predictions)

    E, B = logits.shape
    label = int(label)
    if not (0 <= label < E):
        raise ValueError(f"label {label} out of range for {E} experts")

    kind = _device_kind()
    if num_splits is None:
        num_splits = _default_num_splits(kind)
    if tile_bytes is None:
        tile_bytes = _default_tile_bytes(kind)

    itemsize = jnp.dtype(logits.dtype).itemsize
    # Lane-tile width cap from the per-step byte target (multiple of 128).
    cap_cols = max(128, (tile_bytes // (E * itemsize)) // 128 * 128)
    # Spread B evenly over splits*tiles so tail padding stays < ~128 cols/tile.
    n_tiles = max(1, pl.cdiv(B, num_splits * cap_cols))
    tile_b = _round_up(pl.cdiv(B, num_splits * n_tiles), 128)
    padded_b = _round_up(B, num_splits * tile_b)
    tiles_per_split = padded_b // (num_splits * tile_b)

    if padded_b != B:
        logits = jnp.pad(logits, ((0, 0), (0, padded_b - B)))

    kernel = functools.partial(
        _expert_loss_kernel, num_experts=E, label=label, true_b=B,
        tile_b=tile_b, inv_n=1.0 / float(B * E))

    out = pl.pallas_call(
        kernel,
        out_shape=jax.ShapeDtypeStruct((num_splits * 8, 128), jnp.float32),
        grid_spec=pltpu.PrefetchScalarGridSpec(
            num_scalar_prefetch=0,
            grid=(num_splits, tiles_per_split),
            in_specs=[
                pl.BlockSpec((E, tile_b),
                             lambda c, t, _T=tiles_per_split: (0, c * _T + t)),
            ],
            out_specs=pl.BlockSpec((8, 128), lambda c, t: (c, 0)),
            # Full-tile f32 accumulator: steady state is pure VPU adds; the
            # single cross-lane/sublane reduce happens once in the epilogue.
            scratch_shapes=[pltpu.VMEM((E, tile_b), jnp.float32)],
        ),
        compiler_params=pltpu.CompilerParams(
            dimension_semantics=("parallel", "arbitrary")),
    )(logits)

    partials = out.reshape(num_splits, 8, 128)[:, 0, 0]   # already * 1/(B*E)
    return jnp.sum(partials)


def _reference_expert_loss(expert_predictions, label):
    """Plain-JAX reference mirroring torch BCEWithLogitsLoss semantics."""
    x = jnp.concatenate(expert_predictions, axis=1).astype(jnp.float32)
    e = x.shape[1]
    gt = jax.nn.one_hot(jnp.int32(label), e, dtype=jnp.float32)   # [E]
    gt = jnp.broadcast_to(gt, x.shape)                            # [B, E]
    per_elem = jnp.maximum(x, 0.0) - x * gt + jnp.log1p(jnp.exp(-jnp.abs(x)))
    return jnp.mean(per_elem)


if __name__ == "__main__":
    key = jax.random.PRNGKey(0)

    num_experts = 8   # module __init__ arg
    batch = 2         # each expert prediction: [B, 1] logit

    keys = jax.random.split(key, num_experts)
    expert_predictions = [
        jax.random.normal(k, (batch, 1), dtype=jnp.float32) for k in keys
    ]
    label = 3  # scalar class index, as in forward(expert_predictions, label)

    loss = expert_loss(expert_predictions, label)
    loss = jax.block_until_ready(loss)

    ref = jax.block_until_ready(_reference_expert_loss(expert_predictions, label))
    np.testing.assert_allclose(np.asarray(loss), np.asarray(ref),
                               rtol=1e-5, atol=1e-6)

    print("KERNEL_OK")
</pallas_src>

<mosaic_0001>
module attributes {stable_mosaic.version = 11 : i64} {
  func.func @_expert_loss_kernel(%arg0: i32, %arg1: i32, %arg2: memref<8x128xf32, #tpu.memory_space<vmem>>, %arg3: memref<8x128xf32, #tpu.memory_space<vmem>>, %arg4: memref<8x128xf32, #tpu.memory_space<vmem>>) attributes {dimension_semantics = [#tpu.dimension_semantics<parallel>, #tpu.dimension_semantics<arbitrary>], iteration_bounds = array<i64: 1, 1>, scalar_prefetch = 0 : i64, scratch_operands = 1 : i64, tpu.core_type = #tpu.core_type<tc>, window_params = [{transform_indices = @transform_0, window_bounds = array<i64: 8, 128>}, {transform_indices = @transform_1, window_bounds = array<i64: 8, 128>}]} {
    %c0_i32 = arith.constant 0 : i32
    %0 = arith.cmpi eq, %arg1, %c0_i32 : i32
    %1 = arith.extui %0 : i1 to i32
    %c0_i32_0 = arith.constant 0 : i32
    %2 = arith.cmpi ne, %1, %c0_i32_0 : i32
    scf.if %2 {
      %cst_10 = arith.constant 0.000000e+00 : f32
      %34 = vector.broadcast %cst_10 : f32 to vector<8x128xf32>
      %c0_11 = arith.constant 0 : index
      %c0_12 = arith.constant 0 : index
      %35 = vector.load %arg4[%c0_11, %c0_12] : memref<8x128xf32, #tpu.memory_space<vmem>>, vector<8x128xf32>
      tpu.vector_store %arg4[%c0_11, %c0_12], %34 {strides = array<i32>} : memref<8x128xf32, #tpu.memory_space<vmem>>, vector<8x128xf32>,
    } else {
    }
    %c0 = arith.constant 0 : index
    %c0_1 = arith.constant 0 : index
    %3 = vector.load %arg2[%c0, %c0_1] : memref<8x128xf32, #tpu.memory_space<vmem>>, vector<8x128xf32>
    %4 = tpu.iota {dimensions = array<i32: 0>} : vector<8x1xi32>
    %c3_i32 = arith.constant 3 : i32
    %5 = vector.broadcast %c3_i32 : i32 to vector<8x1xi32>
    %6 = arith.cmpi eq, %4, %5 : vector<8x1xi32>
    %7 = arith.extui %6 : vector<8x1xi1> to vector<8x1xi32>
    %8 = arith.sitofp %7 : vector<8x1xi32> to vector<8x1xf32>
    %cst = arith.constant 0.000000e+00 : f32
    %9 = vector.broadcast %cst : f32 to vector<8x128xf32>
    %10 = arith.maximumf %3, %9 : vector<8x128xf32>
    %11 = vector.broadcast %8 : vector<8x1xf32> to vector<8x128xf32>
    %12 = arith.mulf %3, %11 : vector<8x128xf32>
    %13 = arith.subf %10, %12 : vector<8x128xf32>
    %14 = math.absf %3 : vector<8x128xf32>
    %cst_2 = arith.constant 0.000000e+00 : f32
    %15 = vector.broadcast %cst_2 : f32 to vector<8x128xf32>
    %16 = arith.subf %15, %14 : vector<8x128xf32>
    %17 = math.exp %16 : vector<8x128xf32>
    %18 = math.log1p %17 : vector<8x128xf32>
    %19 = arith.addf %13, %18 : vector<8x128xf32>
    %c1_i32 = arith.constant 1 : i32
    %20 = arith.muli %arg0, %c1_i32 : i32
    %21 = arith.addi %20, %arg1 : i32
    %c128_i32 = arith.constant 128 : i32
    %22 = arith.muli %21, %c128_i32 : i32
    %c128_i32_3 = arith.constant 128 : i32
    %23 = arith.addi %22, %c128_i32_3 : i32
    %c2_i32 = arith.constant 2 : i32
    %24 = arith.cmpi sle, %23, %c2_i32 : i32
    %25 = arith.extui %24 : i1 to i32
    %c0_i32_4 = arith.constant 0 : i32
    %26 = arith.cmpi ne, %25, %c0_i32_4 : i32
    scf.if %26 {
      %c0_10 = arith.constant 0 : index
      %c0_11 = arith.constant 0 : index
      %34 = vector.load %arg4[%c0_10, %c0_11] : memref<8x128xf32, #tpu.memory_space<vmem>>, vector<8x128xf32>
      %35 = arith.addf %34, %19 : vector<8x128xf32>
      %c0_12 = arith.constant 0 : index
      %c0_13 = arith.constant 0 : index
      %36 = vector.load %arg4[%c0_12, %c0_13] : memref<8x128xf32, #tpu.memory_space<vmem>>, vector<8x128xf32>
      tpu.vector_store %arg4[%c0_12, %c0_13], %35 {strides = array<i32>} : memref<8x128xf32, #tpu.memory_space<vmem>>, vector<8x128xf32>,
    } else {
    }
    %c128_i32_5 = arith.constant 128 : i32
    %27 = arith.addi %22, %c128_i32_5 : i32
    %c2_i32_6 = arith.constant 2 : i32
    %28 = arith.cmpi sgt, %27, %c2_i32_6 : i32
    %29 = arith.extui %28 : i1 to i32
    %c0_i32_7 = arith.constant 0 : i32
    %30 = arith.cmpi ne, %29, %c0_i32_7 : i32
    scf.if %30 {
      %34 = tpu.iota {dimensions = array<i32: 1>} : vector<8x128xi32>
      %35 = vector.broadcast %22 : i32 to vector<8x128xi32>
      %36 = arith.addi %35, %34 : vector<8x128xi32>
      %c0_10 = arith.constant 0 : index
      %c0_11 = arith.constant 0 : index
      %37 = vector.load %arg4[%c0_10, %c0_11] : memref<8x128xf32, #tpu.memory_space<vmem>>, vector<8x128xf32>
      %c2_i32_12 = arith.constant 2 : i32
      %38 = vector.broadcast %c2_i32_12 : i32 to vector<8x128xi32>
      %39 = arith.cmpi slt, %36, %38 : vector<8x128xi32>
      %cst_13 = arith.constant 0.000000e+00 : f32
      %40 = vector.broadcast %cst_13 : f32 to vector<8x128xf32>
      %41 = arith.select %39, %19, %40 : vector<8x128xi1>, vector<8x128xf32>
      %42 = arith.addf %37, %41 : vector<8x128xf32>
      %c0_14 = arith.constant 0 : index
      %c0_15 = arith.constant 0 : index
      %43 = vector.load %arg4[%c0_14, %c0_15] : memref<8x128xf32, #tpu.memory_space<vmem>>, vector<8x128xf32>
      tpu.vector_store %arg4[%c0_14, %c0_15], %42 {strides = array<i32>} : memref<8x128xf32, #tpu.memory_space<vmem>>, vector<8x128xf32>,
    } else {
    }
    %c0_i32_8 = arith.constant 0 : i32
    %31 = arith.cmpi eq, %arg1, %c0_i32_8 : i32
    %32 = arith.extui %31 : i1 to i32
    %c0_i32_9 = arith.constant 0 : i32
    %33 = arith.cmpi ne, %32, %c0_i32_9 : i32
    scf.if %33 {
      %c0_10 = arith.constant 0 : index
      %c0_11 = arith.constant 0 : index
      %34 = vector.load %arg4[%c0_10, %c0_11] : memref<8x128xf32, #tpu.memory_space<vmem>>, vector<8x128xf32>
      %35 = vector.shape_cast %34 : vector<8x128xf32> to vector<1x8x128xf32>
      %cst_12 = arith.constant dense<0.000000e+00> : vector<1xf32>
      %36 = vector.multi_reduction <add>, %35, %cst_12 [1, 2] : vector<1x8x128xf32> to vector<1xf32>
      %37 = vector.shape_cast %36 : vector<1xf32> to vector<1x1x1xf32>
      %38 = vector.extract %37[0, 0, 0] : f32 from vector<1x1x1xf32>
      %39 = vector.broadcast %38 : f32 to vector<1x1xf32>
      %cst_13 = arith.constant 6.250000e-02 : f32
      %40 = vector.broadcast %cst_13 : f32 to vector<1x1xf32>
      %41 = arith.mulf %39, %40 : vector<1x1xf32>
      %42 = vector.shape_cast %41 : vector<1x1xf32> to vector<1x1xf32>
      %43 = vector.broadcast %42 : vector<1x1xf32> to vector<8x128xf32>
      %c0_14 = arith.constant 0 : index
      %c0_15 = arith.constant 0 : index
      %44 = vector.load %arg3[%c0_14, %c0_15] : memref<8x128xf32, #tpu.memory_space<vmem>>, vector<8x128xf32>
      tpu.vector_store %arg3[%c0_14, %c0_15], %43 {strides = array<i32>} : memref<8x128xf32, #tpu.memory_space<vmem>>, vector<8x128xf32>,
    } else {
    }
    return
  }
  func.func @transform_0(%arg0: i32, %arg1: i32) -> (i32, i32) {
    %c1_i32 = arith.constant 1 : i32
    %0 = arith.muli %arg0, %c1_i32 : i32
    %1 = arith.addi %0, %arg1 : i32
    %c0_i32 = arith.constant 0 : i32
    %c0_i32_0 = arith.constant 0 : i32
    return %c0_i32, %1 : i32, i32
  }
  func.func @transform_1(%arg0: i32, %arg1: i32) -> (i32, i32) {
    %c0_i32 = arith.constant 0 : i32
    %c0_i32_0 = arith.constant 0 : i32
    return %arg0, %c0_i32 : i32, i32
  }
}

</mosaic_0001>

<llo_original>
// kernel: tpu_custom_call.1
$region0: #{tpu_custom_call.1}
  #allocation0 [shape = 'u32[]', space=smem, size = 0x4, offset = 0x4, fixed_abs, tag = 'smem constant byte address 0x4 - core index']
  #allocation1 [shape = 'u32[144,128]{1,0:T(1,128)}', space=vmem, size = 0x12000, scoped, tag = 'internal scratch']
  #allocation2 [shape = 'f32[8,128]{1,0:T(8,128)}', space=vmem, size = 0x1000, scoped, tag = 'scratch operand']
  %s0 = inlined_call_operand.hbm [shape: f32[8,128], index: 0, kind: input, shape index: {}]
  %s1 = inlined_call_operand.hbm [shape: f32[8,128], index: 1, kind: output, shape index: {}]
  %s2 = sld [smem:[#allocation0]]
  $region34: #{tpu_custom_call.1} parent=0
    _
  %s4 = ssub.s32 1, %s2
  %s5 = scalar_select 0, %s4, %s2
  $region1: #{tpu_custom_call.1} parent=0
    #allocation3 [shape = 'u8[4096]{0}', space=vmem, size = 0x1000, scoped, tag = 'input window, operand 0, single buffered']
    #allocation4 [shape = 's32[1]{0}', space=sflag, size = 0x4, scoped, tag = 'scoped memory for tpu_custom_call.1']
    #allocation5 [shape = 's32[1]{0}', space=sflag, size = 0x4, scoped, tag = 'scoped memory for tpu_custom_call.1']
    #allocation6 [shape = 'u8[4096]{0}', space=vmem, size = 0x1000, scoped, tag = 'output window, operand 0, single buffered']
    %6 = vsyncpa [#allocation4], 0
    %7 = vsyncpa [#allocation5], 0
    // Predicated region
    $region2: #{tpu_custom_call.1} parent=1 // pred_check
      _
    $region3: #{tpu_custom_call.1} parent=1 // pred_check_branch
      %9 = sbr.rel (0) target = $region5
    $region4: #{tpu_custom_call.1} parent=1 // pred_region
      %s10 = sadd.s32 0, 0
      %s12 = ssub.s32 128, 128
      %13 = vsyncadd [#allocation4], %s12
      %s14 = smul.addr %s10, 128
      %s15 = scalar_lea.hbm %s0, %s14
      %s17 = sshll.u32 [#allocation3], 4
      %s18 = int_to_ptr.vmem [resolvable:$true] %s17
      %20 = dma.hbm_to_vmem [thread:$0]  %s15, 128, %s18, [#allocation4]
    $region5: #{tpu_custom_call.1} parent=1 // pred_fallthru
      _
    // Predicated region
    $region6: #{tpu_custom_call.1} parent=1 // pred_check
      _
    $region7: #{tpu_custom_call.1} parent=1 // pred_check_branch
      %22 = sbr.rel (0) target = $region9
    $region8: #{tpu_custom_call.1} parent=1 // pred_region
      %23 = dma.done [#allocation4], 128
    $region9: #{tpu_custom_call.1} parent=1 // pred_fallthru
      _
    %s24 = sadd.s32 0, 0
    %p25 = scmp.eq.s32.totalorder 0, 0
    // Predicated region
    $region10: #{tpu_custom_call.1} parent=1 // pred_check
      %p26 = pneg %p25
    $region11: #{tpu_custom_call.1} parent=1 // pred_check_branch
      %28 = sbr.rel (%p26) target = $region13
    $region12: #{tpu_custom_call.1} parent=1 // pred_region
      %29 = vst [vmem:[#allocation2] sm:$0xff] 0.0
    $region13: #{tpu_custom_call.1} parent=1 // pred_fallthru
      _
    %v30 = vld [vmem:[#allocation3] sm:$0xff]
    %v31 = vlaneseq
    %v32 = vshrl.u32 %v31, 7
    %vm33 = vcmp.eq.s32.totalorder %v32, 3
    %v34 = vsel %vm33, 1, 0
    %v35 = vcvt.s32.f32 %v34
    %v36 = vmax.f32 %v30, 0.0
    %v37 = vmul.f32 %v30, %v35
    %v38 = vsub.f32 %v36, %v37
    %v39 = vand.u32 2147483647, %v30
    %v40 = vsub.f32 0.0, %v39
    %v41 = vmul.f32 %v40, 1.442695
    %v42 = vpow.pop %v41
    %v43 = vadd.f32 %v42, 1.0
    %v44 = vlog2.pop %v43
    %v45 = vmul.f32 %v44, 0.6931472
    %v46 = vmul.f32 -0.5, %v42
    %v47 = vadd.f32 %v46, 1.0
    %v48 = vmul.f32 %v47, %v42
    %v49 = vand.u32 2147483647, %v42
    %vm50 = vcmp.lt.f32.partialorder %v49, 0.0004427343
    %v51 = vsel %vm50, %v48, %v45
    %v52 = vadd.f32 %v38, %v51
    %s53 = sadd.s32 0, 0
    %s54 = smul.u32 %s53, 128
    %s55 = sadd.s32 %s54, 128
    %p56 = scmp.le.s32.totalorder %s55, 2
    // Predicated region
    $region14: #{tpu_custom_call.1} parent=1 // pred_check
      %p57 = pneg %p56
    $region15: #{tpu_custom_call.1} parent=1 // pred_check_branch
      %59 = sbr.rel (%p57) target = $region17
    $region16: #{tpu_custom_call.1} parent=1 // pred_region
      %v60 = vld [vmem:[#allocation2] sm:$0xff]
      %v61 = vadd.f32 %v60, %v52
      %62 = vst [vmem:[#allocation2] sm:$0xff] %v61
    $region17: #{tpu_custom_call.1} parent=1 // pred_fallthru
      _
    %p63 = scmp.gt.s32.totalorder %s55, 2
    // Predicated region
    $region18: #{tpu_custom_call.1} parent=1 // pred_check
      %p64 = pneg %p63
    $region19: #{tpu_custom_call.1} parent=1 // pred_check_branch
      %66 = sbr.rel (%p64) target = $region21
    $region20: #{tpu_custom_call.1} parent=1 // pred_region
      %v67 = vlaneseq
      %v68 = vand.u32 %v67, 127
      %v69 = vstv %s54
      %v70 = vadd.s32 %v69, %v68
      %v71 = vld [vmem:[#allocation2] sm:$0xff]
      %vm72 = vcmp.lt.s32.totalorder %v70, 2
      %v73 = vsel %vm72, %v52, 0.0
      %v74 = vadd.f32 %v71, %v73
      %75 = vst [vmem:[#allocation2] sm:$0xff] %v74
    $region21: #{tpu_custom_call.1} parent=1 // pred_fallthru
      _
    // Predicated region
    $region22: #{tpu_custom_call.1} parent=1 // pred_check
      %p76 = pneg %p25
    $region23: #{tpu_custom_call.1} parent=1 // pred_check_branch
      %78 = sbr.rel (%p76) target = $region25
    $region24: #{tpu_custom_call.1} parent=1 // pred_region
      %v79 = vld [vmem:[#allocation2] sm:$0xff]
      %80 = vadd.xlane.f32.xlu0 %v79
      %v81 = vpop.xlane.xlu0 %80
      %v82 = vrot.slane %v81, 4
      %v83 = vadd.f32 %v81, %v82
      %v84 = vrot.slane %v83, 2
      %v85 = vadd.f32 %v83, %v84
      %v86 = vrot.slane %v85, 1
      %v87 = vadd.f32 %v85, %v86
      %s88 = vtos %v87
      %v89 = vstv %s88
      %v90 = vmul.f32 %v89, 0.0625
      %91 = vst [vmem:[#allocation6] sm:$0xff] %v90
    $region25: #{tpu_custom_call.1} parent=1 // pred_fallthru
      _
    // Predicated region
    $region26: #{tpu_custom_call.1} parent=1 // pred_check
      _
    $region27: #{tpu_custom_call.1} parent=1 // pred_check_branch
      %93 = sbr.rel (0) target = $region29
    $region28: #{tpu_custom_call.1} parent=1 // pred_region
      %s95 = ssub.s32 128, 128
      %96 = vsyncadd [#allocation5], %s95
      %s98 = sshll.u32 [#allocation6], 4
      %s99 = int_to_ptr.vmem [resolvable:$true] %s98
      %101 = dma.vmem_to_hbm [thread:$0]  %s99, 128, %s1, [#allocation5]
    $region29: #{tpu_custom_call.1} parent=1 // pred_fallthru
      _
    // Predicated region
    $region30: #{tpu_custom_call.1} parent=1 // pred_check
      _
    $region31: #{tpu_custom_call.1} parent=1 // pred_check_branch
      %103 = sbr.rel (0) target = $region33
    $region32: #{tpu_custom_call.1} parent=1 // pred_region
      %104 = dma.done [#allocation5], 128
    $region33: #{tpu_custom_call.1} parent=1 // pred_fallthru
      _
    %105 = vsyncpa [#allocation4], 1
    %106 = vsyncpa [#allocation5], 1

</llo_original>
